<compile_context>
chip_gen: v5e
topology: v5e:2x2
jax: 0.10.0
libtpu: 0.0.40
codegen_flags: <defaults>
</compile_context>

<pallas_src>
import functools
import math

import jax
import jax.numpy as jnp
from jax import lax
from jax.experimental import pallas as pl
from jax.experimental.pallas import tpu as pltpu


_VMEM_LIMIT = 48 * 1024 * 1024          # < 64 MiB physical on v7x, < 128 MiB on v5e/v6e
_LINEAR_TILE_BUDGET = 30 * 1024 * 1024  # leave headroom under _VMEM_LIMIT


def _pick_tile(dim, target):
    """Largest tile <= target that divides `dim` (halving fallback)."""
    # TODO(synk): pad + mask instead of shrinking for pathological (prime) dims.
    t = min(target, dim)
    while t > 1 and dim % t != 0:
        t //= 2
    return t if (t > 0 and dim % t == 0) else dim


def _pick_head_group(n_head, head_dim, tq, tk, lanes=512, score_budget=8 << 20):
    """Largest divisor G of n_head with <= `lanes` lanes per group and an f32 score
    tile (G, tq, tk) within `score_budget`; prefer 128-lane-aligned (or full) G*D."""
    divisors = [g for g in range(1, n_head + 1) if n_head % g == 0]
    valid = [g for g in divisors
             if g == 1 or (g * head_dim <= lanes and g * tq * tk * 4 <= score_budget)]
    aligned = [g for g in valid if (g * head_dim) % 128 == 0 or g == n_head]
    pool = aligned if aligned else valid
    return max(pool)


# ----------------------------------------------------------------------------
# Kernel 1: dense linear  y = x @ W + b  with a VMEM-resident weight panel.
#   grid = (N // tn, M // tm): the weight panel index depends only on the outer
#   (column-panel) axis, so it is fetched once and reused across the whole M sweep.
# ----------------------------------------------------------------------------
def _linear_kernel(x_ref, w_ref, b_ref, o_ref):
    acc = jnp.dot(x_ref[...], w_ref[...], preferred_element_type=jnp.float32)
    o_ref[...] = (acc + b_ref[...].astype(jnp.float32)).astype(o_ref.dtype)


def _linear_tiles(M, K, N, itemsize, budget=_LINEAR_TILE_BUDGET):
    def footprint(tm, tn):
        # double-buffered x / w / b / out blocks + f32 matmul result
        return itemsize * 2 * (tm * K + K * tn + tn + tm * tn) + 4 * tm * tn

    tm = _pick_tile(M, 512)
    tn = N                                # full weight panel resident (preferred)
    while footprint(tm, tn) > budget and tm > 8:
        tm = _pick_tile(M, tm // 2)
    if footprint(tm, tn) > budget:
        for cand in range((N // 128) * 128, 0, -128):   # 128-aligned column panels
            if N % cand == 0 and footprint(tm, cand) <= budget:
                tn = cand
                break
    return tm, tn


def pallas_linear(x2d, w, b):
    """x2d: (M, K), w: (K, N), b: (N,) -> (M, N) in x2d.dtype."""
    M, K = x2d.shape
    N = w.shape[1]
    itemsize = x2d.dtype.itemsize
    tm, tn = _linear_tiles(M, K, N, itemsize)
    grid = (N // tn, M // tm)             # weight-panel axis outer, M streaming inner

    return pl.pallas_call(
        _linear_kernel,
        out_shape=jax.ShapeDtypeStruct((M, N), x2d.dtype),
        grid=grid,
        in_specs=[
            pl.BlockSpec((tm, K), lambda j, i: (i, 0)),
            pl.BlockSpec((K, tn), lambda j, i: (0, j)),   # constant across the i sweep
            pl.BlockSpec((1, tn), lambda j, i: (0, j)),
        ],
        out_specs=pl.BlockSpec((tm, tn), lambda j, i: (i, j)),
        compiler_params=pltpu.CompilerParams(
            dimension_semantics=("parallel", "parallel"),
            vmem_limit_bytes=_VMEM_LIMIT,
        ),
        cost_estimate=pl.CostEstimate(
            flops=2 * M * N * K,
            transcendentals=0,
            bytes_accessed=itemsize * (M * K + K * N + M * N),
        ),
    )(x2d, w, b.reshape(1, N))


# ----------------------------------------------------------------------------
# Kernel 2: flash-style causal attention over a flattened (qi, ki) causal grid.
#   q_ref : (tq, G*D) if q_native else (G, tq, D)
#   k_ref, v_ref : (G, tk, D)  (sliced out of `present`)
#   o_ref : (tq, G*D)  -- merge_heads fused into one lane-dense store
# Assumes tq == tk and square self-attention (layer_past=None).
# ----------------------------------------------------------------------------
def _flash_attn_kernel(qi_ref, ki_ref, q_ref, k_ref, v_ref, o_ref,
                       qt_ref, m_ref, l_ref, acc_ref, *, scale_const, q_native):
    s_id = pl.program_id(2)
    qi = qi_ref[s_id]
    ki = ki_ref[s_id]
    G, tq, D = acc_ref.shape
    tk = k_ref.shape[1]

    @pl.when(ki == 0)                     # new query row: stage q and reset state
    def _start_row():
        q = q_ref[...]
        if q_native:
            q = jnp.swapaxes(q.reshape(tq, G, D), 0, 1)     # (tq, G*D) -> (G, tq, D)
        if scale_const != 1.0:
            q = q * jnp.asarray(scale_const, q.dtype)       # fold 1/sqrt(D) into q once
        qt_ref[...] = q
        m_ref[...] = jnp.full(m_ref.shape, -jnp.inf, jnp.float32)
        l_ref[...] = jnp.zeros(l_ref.shape, jnp.float32)
        acc_ref[...] = jnp.zeros(acc_ref.shape, jnp.float32)

    def _update(masked):
        s = jnp.einsum("gqd,gkd->gqk", qt_ref[...], k_ref[...],
                       preferred_element_type=jnp.float32)   # (G, tq, tk) f32
        if masked:                        # only the diagonal tile pays for the mask
            row = lax.broadcasted_iota(jnp.int32, (G, tq, tk), 1)
            col = lax.broadcasted_iota(jnp.int32, (G, tq, tk), 2)
            s = jnp.where(col <= row, s, -1e10)
        m_prev = m_ref[...]
        m_new = jnp.maximum(m_prev, jnp.max(s, axis=-1, keepdims=True))
        alpha = jnp.exp(m_prev - m_new)
        p = jnp.exp(s - m_new)
        l_ref[...] = alpha * l_ref[...] + jnp.sum(p, axis=-1, keepdims=True)
        acc_ref[...] = alpha * acc_ref[...] + jnp.einsum(
            "gqk,gkd->gqd", p.astype(v_ref.dtype), v_ref[...],
            preferred_element_type=jnp.float32)
        m_ref[...] = m_new

    @pl.when(ki < qi)                     # fully visible KV tile: no mask arithmetic
    def _off_diag():
        _update(masked=False)

    @pl.when(ki == qi)                    # diagonal tile: mask, normalize, store
    def _diag_and_finalize():
        _update(masked=True)
        out = acc_ref[...] * pl.reciprocal(l_ref[...], approx=False)   # (G, tq, D) f32
        # Single lane-dense store; the (G, tq) transpose rides the otherwise idle XLU.
        o_ref[...] = jnp.swapaxes(out, 0, 1).reshape(tq, G * D).astype(o_ref.dtype)


def pallas_causal_attention(qkv, present, *, scale, t_tile=512, head_lanes=512):
    """qkv: (B, T, 3*nx) from c_attn; present: (2, B, H, T, D). Returns (B, T, nx)."""
    _, B, H, T, D = present.shape
    nx = H * D
    assert qkv.shape == (B, T, 3 * nx)

    tq = tk = _pick_tile(T, t_tile)
    G = _pick_head_group(H, D, tq, tk, lanes=head_lanes)
    nq = T // tq
    n_steps = nq * (nq + 1) // 2          # only the causally live (qi, ki) pairs
    scale_const = (1.0 / math.sqrt(D)) if scale else 1.0

    # Consume q straight from the c_attn output (no split_heads HBM pass) when the
    # head-group block is lane-aligned; otherwise fall back to the (B, H, T, D) layout.
    q_native = ((G * D) % 128 == 0) and (tq == T or tq % 8 == 0)
    if q_native:
        q_in = qkv                                       # q occupies [:, :, :nx]
        q_spec = pl.BlockSpec((None, tq, G * D),
                              lambda b, hg, s, qt, kt: (b, qt[s], hg))
    else:
        q_in = qkv[:, :, :nx].reshape(B, T, H, D).transpose(0, 2, 1, 3)
        q_spec = pl.BlockSpec((None, G, tq, D),
                              lambda b, hg, s, qt, kt: (b, hg, qt[s], 0))

    # k / v are read directly out of `present` (leading dim 0 = key, 1 = value).
    k_spec = pl.BlockSpec((None, None, G, tk, D),
                          lambda b, hg, s, qt, kt: (0, b, hg, kt[s], 0))
    v_spec = pl.BlockSpec((None, None, G, tk, D),
                          lambda b, hg, s, qt, kt: (1, b, hg, kt[s], 0))
    out_spec = pl.BlockSpec((None, tq, G * D),
                            lambda b, hg, s, qt, kt: (b, qt[s], hg))

    # Scalar-prefetched (qi, ki) schedule for the flattened causal grid.
    qi_list, ki_list = [], []
    for qi in range(nq):
        for ki in range(qi + 1):
            qi_list.append(qi)
            ki_list.append(ki)
    qi_tab = jnp.asarray(qi_list, dtype=jnp.int32)
    ki_tab = jnp.asarray(ki_list, dtype=jnp.int32)

    act_dtype = qkv.dtype
    grid_spec = pltpu.PrefetchScalarGridSpec(
        num_scalar_prefetch=2,
        grid=(B, H // G, n_steps),
        in_specs=[q_spec, k_spec, v_spec],
        out_specs=out_spec,
        scratch_shapes=[
            pltpu.VMEM((G, tq, D), act_dtype),     # scaled, head-major q tile
            pltpu.VMEM((G, tq, 1), jnp.float32),   # running max
            pltpu.VMEM((G, tq, 1), jnp.float32),   # running sum
            pltpu.VMEM((G, tq, D), jnp.float32),   # f32 output accumulator
        ],
    )

    return pl.pallas_call(
        functools.partial(_flash_attn_kernel,
                          scale_const=scale_const, q_native=q_native),
        out_shape=jax.ShapeDtypeStruct((B, T, nx), act_dtype),
        grid_spec=grid_spec,
        compiler_params=pltpu.CompilerParams(
            dimension_semantics=("parallel", "parallel", "arbitrary"),
            vmem_limit_bytes=_VMEM_LIMIT,
        ),
        cost_estimate=pl.CostEstimate(
            flops=2 * B * H * T * T * D,           # causal QK^T + PV
            transcendentals=B * H * T * T // 2,
            bytes_accessed=act_dtype.itemsize * 4 * B * H * T * D,
        ),
    )(qi_tab, ki_tab, q_in, present, present)


# ----------------------------------------------------------------------------
# Full forward pass (matches PyTorch Attention.forward with layer_past=None)
# ----------------------------------------------------------------------------
def attention_forward(x, params, *, n_head, scale=False):
    """x: (B, T, nx). Returns (a, present) like the PyTorch module.

    params: w_attn (nx, 3*nx), b_attn (3*nx,), w_proj (nx, nx), b_proj (nx,)
            (weights stored so the kernel computes x @ W + b, i.e. W = torch_weight.T)
    """
    # TODO(synk): layer_past (KV-cache concatenation) path not implemented.
    B, T, nx = x.shape
    assert nx % n_head == 0
    D = nx // n_head

    qkv = pallas_linear(x.reshape(B * T, nx), params["w_attn"], params["b_attn"])
    qkv = qkv.reshape(B, T, 3 * nx)

    # present = stack(split_heads(k), split_heads(v)) -> (2, B, H, T, D); built with a
    # single fused slice+transpose pass (no separate kh/vh materialization + stack).
    present = qkv[:, :, nx:].reshape(B, T, 2, n_head, D).transpose(2, 0, 3, 1, 4)

    # Attention kernel writes (B, T, nx) directly (merge_heads fused, lane-dense).
    a = pallas_causal_attention(qkv, present, scale=scale)

    out = pallas_linear(a.reshape(B * T, nx), params["w_proj"], params["b_proj"])
    return out.reshape(B, T, nx), present


# ----------------------------------------------------------------------------
# Pure-JAX reference (numerical sanity check)
# ----------------------------------------------------------------------------
def reference_forward(x, params, *, n_head, scale=False):
    B, T, nx = x.shape
    D = nx // n_head
    qkv = x.reshape(B * T, nx) @ params["w_attn"] + params["b_attn"]
    qkv = qkv.reshape(B, T, 3 * nx)
    q, k, v = jnp.split(qkv, 3, axis=2)
    sh = lambda t: t.reshape(B, T, n_head, D).transpose(0, 2, 1, 3)
    qh, kh, vh = sh(q), sh(k), sh(v)
    w = jnp.einsum("bhqd,bhkd->bhqk", qh, kh)
    if scale:
        w = w / jnp.sqrt(jnp.float32(D))
    b = jnp.tril(jnp.ones((T, T), jnp.float32))[None, None]
    w = w * b - 1.0e10 * (1 - b)
    w = jax.nn.softmax(w, axis=-1)
    a = jnp.einsum("bhqk,bhkd->bhqd", w, vh)
    a = a.transpose(0, 2, 1, 3).reshape(B, T, nx)
    out = a.reshape(B * T, nx) @ params["w_proj"] + params["b_proj"]
    present = jnp.stack([kh, vh])
    return out.reshape(B, T, nx), present


# ----------------------------------------------------------------------------
if __name__ == "__main__":
    def make_params(key, nx, dtype):
        k_wa, k_ba, k_wp, k_bp = jax.random.split(key, 4)
        return {
            "w_attn": 0.02 * jax.random.normal(k_wa, (nx, 3 * nx), dtype=dtype),
            "b_attn": 0.02 * jax.random.normal(k_ba, (3 * nx,), dtype=dtype),
            "w_proj": 0.02 * jax.random.normal(k_wp, (nx, nx), dtype=dtype),
            "b_proj": 0.02 * jax.random.normal(k_bp, (nx,), dtype=dtype),
        }

    root = jax.random.PRNGKey(0)

    # --- small GPT-2-like config: nx=32, n_head=4, seq=8, batch=2 (f32) ---
    B, T, nx, n_head = 2, 8, 32, 4
    k_x, k_p = jax.random.split(jax.random.fold_in(root, 0))
    x = jax.random.normal(k_x, (B, T, nx), dtype=jnp.float32)
    params = make_params(k_p, nx, jnp.float32)

    out, present = attention_forward(x, params, n_head=n_head, scale=False)
    out = jax.block_until_ready(out)
    present = jax.block_until_ready(present)
    ref_out, ref_present = reference_forward(x, params, n_head=n_head, scale=False)
    assert out.shape == (B, T, nx)
    assert present.shape == (2, B, n_head, T, nx // n_head)
    assert jnp.allclose(out, ref_out, atol=2e-3, rtol=2e-3)
    assert jnp.allclose(present, ref_present, atol=1e-5, rtol=1e-5)

    # --- scale=True (1/sqrt(D) folded into q inside the kernel) ---
    out_s, _ = attention_forward(x, params, n_head=n_head, scale=True)
    ref_s, _ = reference_forward(x, params, n_head=n_head, scale=True)
    assert jnp.allclose(jax.block_until_ready(out_s), ref_s, atol=2e-3, rtol=2e-3)

    # --- bf16 activations/weights (MXU fast path), f32 softmax/accumulation ---
    xb = x.astype(jnp.bfloat16)
    pb = {name: val.astype(jnp.bfloat16) for name, val in params.items()}
    out_b, _ = attention_forward(xb, pb, n_head=n_head, scale=False)
    out_b = jax.block_until_ready(out_b)
    assert jnp.allclose(out_b.astype(jnp.float32), ref_out, atol=3e-2, rtol=3e-2)

    # --- larger smoke test exercising the production path: 512x512 tiles, flattened
    #     causal grid (nq=2 -> 3 live steps), native-layout q (128-lane aligned head
    #     group) and resident weight panels in the linears. ---
    B2, T2, nx2, H2 = 2, 1024, 256, 2
    k_x2, k_p2 = jax.random.split(jax.random.fold_in(root, 1))
    x2 = jax.random.normal(k_x2, (B2, T2, nx2), dtype=jnp.float32)
    p2 = make_params(k_p2, nx2, jnp.float32)
    out2, present2 = attention_forward(x2, p2, n_head=H2, scale=False)
    out2 = jax.block_until_ready(out2)
    ref_out2, ref_present2 = reference_forward(x2, p2, n_head=H2, scale=False)
    assert out2.shape == (B2, T2, nx2)
    assert jnp.allclose(out2, ref_out2, atol=5e-3, rtol=5e-3)
    assert jnp.allclose(jax.block_until_ready(present2), ref_present2,
                        atol=2e-3, rtol=2e-3)

    print("KERNEL_OK")
</pallas_src>

<mosaic_0001>
module attributes {stable_mosaic.version = 11 : i64} {
  func.func @_linear_kernel(%arg0: i32, %arg1: i32, %arg2: memref<16x32xf32, #tpu.memory_space<vmem>>, %arg3: memref<32x96xf32, #tpu.memory_space<vmem>>, %arg4: memref<1x96xf32, #tpu.memory_space<vmem>>, %arg5: memref<16x96xf32, #tpu.memory_space<vmem>>) attributes {dimension_semantics = [#tpu.dimension_semantics<parallel>, #tpu.dimension_semantics<parallel>], iteration_bounds = array<i64: 1, 1>, scalar_prefetch = 0 : i64, scratch_operands = 0 : i64, tpu.core_type = #tpu.core_type<tc>, window_params = [{transform_indices = @transform_0, window_bounds = array<i64: 16, 32>}, {transform_indices = @transform_1, window_bounds = array<i64: 32, 96>}, {transform_indices = @transform_2, window_bounds = array<i64: 1, 96>}, {transform_indices = @transform_3, window_bounds = array<i64: 16, 96>}]} {
    %c0 = arith.constant 0 : index
    %c0_0 = arith.constant 0 : index
    %0 = vector.load %arg2[%c0, %c0_0] : memref<16x32xf32, #tpu.memory_space<vmem>>, vector<16x32xf32>
    %c0_1 = arith.constant 0 : index
    %c0_2 = arith.constant 0 : index
    %1 = vector.load %arg3[%c0_1, %c0_2] : memref<32x96xf32, #tpu.memory_space<vmem>>, vector<32x96xf32>
    %cst = arith.constant dense<0.000000e+00> : vector<16x96xf32>
    %2 = tpu.matmul %0, %1, %cst {dimension_numbers = #tpu.dot_dimension_numbers<[1], [0], [0], [1], [0, 0, 1, 1], [], []>} : vector<16x32xf32>, vector<32x96xf32>, vector<16x96xf32> -> vector<16x96xf32>
    %c0_3 = arith.constant 0 : index
    %c0_4 = arith.constant 0 : index
    %3 = vector.load %arg4[%c0_3, %c0_4] : memref<1x96xf32, #tpu.memory_space<vmem>>, vector<1x96xf32>
    %4 = vector.broadcast %3 : vector<1x96xf32> to vector<16x96xf32>
    %5 = arith.addf %2, %4 : vector<16x96xf32>
    %c0_5 = arith.constant 0 : index
    %c0_6 = arith.constant 0 : index
    %6 = vector.load %arg5[%c0_5, %c0_6] : memref<16x96xf32, #tpu.memory_space<vmem>>, vector<16x96xf32>
    tpu.vector_store %arg5[%c0_5, %c0_6], %5 {strides = array<i32>} : memref<16x96xf32, #tpu.memory_space<vmem>>, vector<16x96xf32>,
    return
  }
  func.func @transform_0(%arg0: i32, %arg1: i32) -> (i32, i32) {
    %c0_i32 = arith.constant 0 : i32
    %c0_i32_0 = arith.constant 0 : i32
    return %arg1, %c0_i32 : i32, i32
  }
  func.func @transform_1(%arg0: i32, %arg1: i32) -> (i32, i32) {
    %c0_i32 = arith.constant 0 : i32
    %c0_i32_0 = arith.constant 0 : i32
    return %c0_i32, %arg0 : i32, i32
  }
  func.func @transform_2(%arg0: i32, %arg1: i32) -> (i32, i32) {
    %c0_i32 = arith.constant 0 : i32
    %c0_i32_0 = arith.constant 0 : i32
    return %c0_i32, %arg0 : i32, i32
  }
  func.func @transform_3(%arg0: i32, %arg1: i32) -> (i32, i32) {
    %c0_i32 = arith.constant 0 : i32
    return %arg1, %arg0 : i32, i32
  }
}

</mosaic_0001>

<llo_original>
// kernel: tpu_custom_call.1
$region0: #{tpu_custom_call.1}
  #allocation0 [shape = 'u32[]', space=smem, size = 0x4, offset = 0x4, fixed_abs, tag = 'smem constant byte address 0x4 - core index']
  #allocation1 [shape = 'u32[72,128]{1,0:T(1,128)}', space=vmem, size = 0x9000, scoped, tag = 'internal scratch']
  %s0 = inlined_call_operand.hbm [shape: f32[16,32], index: 0, kind: input, shape index: {}]
  %s1 = inlined_call_operand.hbm [shape: f32[32,96], index: 1, kind: input, shape index: {}]
  %s2 = inlined_call_operand.vmem [shape: f32[1,96], index: 2, kind: input, shape index: {}]
  %s3 = inlined_call_operand.hbm [shape: f32[16,96], index: 3, kind: output, shape index: {}]
  %s4 = sld [smem:[#allocation0]]
  $region30: #{tpu_custom_call.1} parent=0
    _
  %s6 = ssub.s32 1, %s4
  %s7 = scalar_select 0, %s6, %s4
  $region1: #{tpu_custom_call.1} parent=0
    #allocation2 [shape = 'u8[8192]{0}', space=vmem, size = 0x2000, scoped, tag = 'input window, operand 0, single buffered']
    #allocation3 [shape = 's32[1]{0}', space=sflag, size = 0x4, scoped, tag = 'scoped memory for tpu_custom_call.1']
    #allocation4 [shape = 's32[1]{0}', space=sflag, size = 0x4, scoped, tag = 'scoped memory for tpu_custom_call.1']
    #allocation5 [shape = 'u8[16384]{0}', space=vmem, size = 0x4000, scoped, tag = 'input window, operand 1, single buffered']
    #allocation6 [shape = 's32[1]{0}', space=sflag, size = 0x4, scoped, tag = 'scoped memory for tpu_custom_call.1']
    #allocation7 [shape = 'u8[8192]{0}', space=vmem, size = 0x2000, scoped, tag = 'output window, operand 0, single buffered']
    %8 = vsyncpa [#allocation3], 0
    %9 = vsyncpa [#allocation6], 0
    %10 = vsyncpa [#allocation4], 0
    // Predicated region
    $region2: #{tpu_custom_call.1} parent=1 // pred_check
      _
    $region3: #{tpu_custom_call.1} parent=1 // pred_check_branch
      %12 = sbr.rel (0) target = $region5
    $region4: #{tpu_custom_call.1} parent=1 // pred_region
      %14 = vsyncadd [#allocation3], 0
      %s15 = sshll.u32 %s0, 4
      %s16 = int_to_ptr.hbm [resolvable:$true] %s15
      %s17 = sshll.u32 [#allocation2], 4
      %s18 = int_to_ptr.vmem [resolvable:$true] %s17
      %23 = dma.hbm_to_vmem [thread:$0]  %s16, 256, %s18, [#allocation3], 128, 128, 8
    $region5: #{tpu_custom_call.1} parent=1 // pred_fallthru
      _
    // Predicated region
    $region6: #{tpu_custom_call.1} parent=1 // pred_check
      _
    $region7: #{tpu_custom_call.1} parent=1 // pred_check_branch
      %25 = sbr.rel (0) target = $region9
    $region8: #{tpu_custom_call.1} parent=1 // pred_region
      %27 = vsyncadd [#allocation6], 0
      %s28 = sshll.u32 %s1, 4
      %s29 = int_to_ptr.hbm [resolvable:$true] %s28
      %s30 = sshll.u32 [#allocation5], 4
      %s31 = int_to_ptr.vmem [resolvable:$true] %s30
      %36 = dma.hbm_to_vmem [thread:$0]  %s29, 512, %s31, [#allocation6], 128, 128, 8
    $region9: #{tpu_custom_call.1} parent=1 // pred_fallthru
      _
    // Predicated region
    $region10: #{tpu_custom_call.1} parent=1 // pred_check
      _
    $region11: #{tpu_custom_call.1} parent=1 // pred_check_branch
      %38 = sbr.rel (0) target = $region13
    $region12: #{tpu_custom_call.1} parent=1 // pred_region
      _
    $region13: #{tpu_custom_call.1} parent=1 // pred_fallthru
      _
    // Predicated region
    $region14: #{tpu_custom_call.1} parent=1 // pred_check
      _
    $region15: #{tpu_custom_call.1} parent=1 // pred_check_branch
      %40 = sbr.rel (0) target = $region17
    $region16: #{tpu_custom_call.1} parent=1 // pred_region
      %42 = dma.done [#allocation3], 256
    $region17: #{tpu_custom_call.1} parent=1 // pred_fallthru
      _
    // Predicated region
    $region18: #{tpu_custom_call.1} parent=1 // pred_check
      _
    $region19: #{tpu_custom_call.1} parent=1 // pred_check_branch
      %44 = sbr.rel (0) target = $region21
    $region20: #{tpu_custom_call.1} parent=1 // pred_region
      %46 = dma.done [#allocation6], 512
    $region21: #{tpu_custom_call.1} parent=1 // pred_fallthru
      _
    %v47 = vld [vmem:[#allocation2] sm:$0xff]
    %v48 = vld [vmem:[#allocation2 + $0x8] sm:$0xff]
    %v49 = vld [vmem:[#allocation5] sm:$0xff]
    %v50 = vld [vmem:[#allocation5 + $0x8] sm:$0xff]
    %v51 = vld [vmem:[#allocation5 + $0x10] sm:$0xff]
    %v52 = vld [vmem:[#allocation5 + $0x18] sm:$0xff]
    %v53 = vld [vmem:[%s2] sm:$0x1]
    %v55 = vperm.slane %v53, 0
    %vm57 = vcmask 261120
    %v59 = vsel %vm57, %v47, 0
    %v62 = vsel %vm57, %v48, 0
    %64 = vmatpush.msra.mxu0 0.0
    %65 = vmatpush.msra.mxu0 0.0
    %66 = vmatpush.msra.mxu0 0.0
    %67 = vmatpush.msra.mxu0 0.0
    %68 = vmatpush.msra.mxu0 0.0
    %69 = vmatpush.msra.mxu0 0.0
    %70 = vmatpush.msra.mxu0 0.0
    %71 = vmatpush.msra.mxu0 0.0
    %72 = vmatpush.msra.mxu0 0.0
    %73 = vmatpush.msra.mxu0 0.0
    %74 = vmatpush.msra.mxu0 0.0
    %75 = vmatpush.msra.mxu0 0.0
    %76 = vmatpush.msra.mxu0 %v52
    %77 = vmatpush.msra.mxu0 %v51
    %78 = vmatpush.msra.mxu0 %v50
    %79 = vmatpush.msra.mxu0 %v49
    %80 = vmatmul.f32.gmra.mxu0 %v59
    %v81 = vpop.f32.mrf.mxu0
    %v82 = vadd.f32 %v55, %v81
    %83 = vmatmul.f32.gmra.mxu0 %v62
    %v84 = vpop.f32.mrf.mxu0
    %v85 = vadd.f32 %v55, %v84
    %86 = vdwg.mxu0
    %vm87 = vcmask 785408
    %88 = vst.msk [vmem:[#allocation7] sm:$0xff] %vm87, %v82
    %89 = vst.msk [vmem:[#allocation7 + $0x8] sm:$0xff] %vm87, %v85
    // Predicated region
    $region22: #{tpu_custom_call.1} parent=1 // pred_check
      _
    $region23: #{tpu_custom_call.1} parent=1 // pred_check_branch
      %91 = sbr.rel (0) target = $region25
    $region24: #{tpu_custom_call.1} parent=1 // pred_region
      %93 = vsyncadd [#allocation4], 0
      %s94 = sshll.u32 [#allocation7], 4
      %s95 = int_to_ptr.vmem [resolvable:$true] %s94
      %s96 = sshll.u32 %s3, 4
      %s97 = int_to_ptr.hbm [resolvable:$true] %s96
      %102 = dma.vmem_to_hbm [thread:$0]  %s95, 256, %s97, [#allocation4], 128, 128, 8
    $region25: #{tpu_custom_call.1} parent=1 // pred_fallthru
      _
    // Predicated region
    $region26: #{tpu_custom_call.1} parent=1 // pred_check
      _
    $region27: #{tpu_custom_call.1} parent=1 // pred_check_branch
      %104 = sbr.rel (0) target = $region29
    $region28: #{tpu_custom_call.1} parent=1 // pred_region
      %106 = dma.done [#allocation4], 256
    $region29: #{tpu_custom_call.1} parent=1 // pred_fallthru
      _
    %107 = vsyncpa [#allocation3], 1
    %108 = vsyncpa [#allocation6], 1
    %109 = vsyncpa [#allocation4], 1

</llo_original>
